<compile_context>
chip_gen: v6e
topology: v6e:2x2x1
jax: 0.10.0
libtpu: 0.0.40
codegen_flags: <defaults>
</compile_context>

<pallas_src>
import jax
import jax.numpy as jnp
from jax.experimental import pallas as pl
from jax.experimental.pallas import tpu as pltpu


def _round_up(x, m):
    return (x + m - 1) // m * m


def _choose_tile(dim, tile_max, candidates=(512, 768, 1024, 1536, 2048, 4096)):
    """Pick a lane-dense tile (multiple of 128) minimizing padding waste."""
    dim128 = _round_up(dim, 128)
    if dim128 <= tile_max:
        return dim128
    best_key, best_c = None, None
    for c in candidates:
        if c > tile_max:
            continue
        key = (_round_up(dim, c) - dim, -c)      # least waste, then biggest tile
        if best_key is None or key < best_key:
            best_key, best_c = key, c
    return best_c if best_c is not None else 128


def _vmem_limit(need_bytes):
    cap = 128 * 1024 * 1024
    try:
        cap = int(pltpu.get_tpu_info().vmem_capacity_bytes)
    except Exception:  # best-effort hardware query
        pass
    return int(min(max(need_bytes + (4 << 20), 32 << 20), cap))


def _embed_h_kernel(idx_ref, emb_ref, w1_ref, b1_ref, h_ref):
    # Fused embedding gather + Linear(H, Ph) + Tanh for one (token, Ph) tile.
    # Gather is a one-hot matmul against the VMEM-resident embedding table:
    # exact for bf16 values, MXU-friendly, no dynamic gather lowering needed.
    idx = idx_ref[...]                                               # (tm, 1) i32
    tm = idx.shape[0]
    p_pad = emb_ref.shape[0]
    onehot = (jax.lax.broadcasted_iota(jnp.int32, (tm, p_pad), 1) == idx)
    x = jnp.dot(onehot.astype(emb_ref.dtype), emb_ref[...],
                preferred_element_type=jnp.float32)                  # (tm, H_pad)
    h = jnp.dot(x.astype(w1_ref.dtype), w1_ref[...],
                preferred_element_type=jnp.float32)                  # (tm, tp)
    # f32 bias + tanh (v5e has no bf16 VPU/EUP).  Padded Ph columns stay exactly
    # zero because w1/b1 padding is zero (and w2's padded rows are zero too).
    h_ref[...] = jnp.tanh(h + b1_ref[...]).astype(h_ref.dtype)


def _out_kernel(h_ref, w2_ref, b2_ref, o_ref):
    # Second Linear: out = h @ w2 + b2, f32 accumulation, tight epilogue.
    acc = jnp.dot(h_ref[...], w2_ref[...], preferred_element_type=jnp.float32)
    o_ref[...] = (acc + b2_ref[...]).astype(o_ref.dtype)


def prepare_prefix_encoder_params(emb_table, w1, b1, w2, b2, *,
                                  tp_max=2048, tn_max=2048,
                                  out_dtype=jnp.float32):
    """Pad + cast PrefixEncoder weights ONCE (hoisted out of the forward path).

    emb_table: (pre_seq_len, H)   w1: (H, Ph)  b1: (Ph,)
    w2: (Ph, O)  b2: (O,)  with O = 2 * num_layers * H
    Set out_dtype=jnp.bfloat16 if the consumer accepts bf16 (halves writeback).
    """
    P, H = emb_table.shape
    Ph = w1.shape[1]
    O = w2.shape[1]

    H_pad = _round_up(H, 128)
    P_pad = _round_up(P, 8)
    tp = _choose_tile(Ph, tp_max)            # Ph tile (kernel A streams w1)
    Ph_pad = _round_up(Ph, tp)
    tn = _choose_tile(O, tn_max)             # output tile (kernel B streams w2)
    O_pad = _round_up(O, tn)

    emb_p = jnp.zeros((P_pad, H_pad), jnp.bfloat16).at[:P, :H].set(
        emb_table.astype(jnp.bfloat16))
    w1_p = jnp.zeros((H_pad, Ph_pad), jnp.bfloat16).at[:H, :Ph].set(
        w1.astype(jnp.bfloat16))
    b1_p = jnp.zeros((1, Ph_pad), jnp.float32).at[:, :Ph].set(
        b1.reshape(1, Ph).astype(jnp.float32))
    w2_p = jnp.zeros((Ph_pad, O_pad), jnp.bfloat16).at[:Ph, :O].set(
        w2.astype(jnp.bfloat16))
    b2_p = jnp.zeros((1, O_pad), jnp.float32).at[:, :O].set(
        b2.reshape(1, O).astype(jnp.float32))

    arrays = dict(emb=emb_p, w1=w1_p, b1=b1_p, w2=w2_p, b2=b2_p)
    meta = dict(P=P, H=H, Ph=Ph, O=O, P_pad=P_pad, H_pad=H_pad,
                Ph_pad=Ph_pad, O_pad=O_pad, tp=tp, tn=tn,
                out_dtype=jnp.dtype(out_dtype))
    return arrays, meta


def prefix_encoder_forward(prefix, arrays, meta, *, tm_max=512):
    """prefix: (B, L) int indices -> (B, L, O) with O = 2 * num_layers * hidden."""
    B, L = prefix.shape
    M = B * L
    P_pad, H_pad = meta["P_pad"], meta["H_pad"]
    Ph_pad, O_pad = meta["Ph_pad"], meta["O_pad"]
    tp, tn, O = meta["tp"], meta["tn"], meta["O"]
    out_dtype = meta["out_dtype"]

    # Big token tiles (more rows per streamed w2 byte); n_m == 1 for typical
    # prefix workloads (M = B * pre_seq_len is small).
    tm = min(_round_up(tm_max, 8), _round_up(M, 8))
    M_pad = _round_up(M, tm)
    n_m, n_p, n_n = M_pad // tm, Ph_pad // tp, O_pad // tn

    # Only per-call padding: the tiny index vector.
    idx = jnp.zeros((M_pad, 1), jnp.int32).at[:M, 0].set(
        prefix.reshape(-1).astype(jnp.int32))

    # ---- kernel A: fused gather + Linear(H, Ph) + tanh -> h (bf16) ----
    need_a = 2 * (tm * 4 + P_pad * H_pad * 2 + H_pad * tp * 2 + tp * 4
                  + tm * tp * 2)
    cost_a = pl.CostEstimate(
        flops=2 * M_pad * P_pad * H_pad * n_p + 2 * M_pad * H_pad * Ph_pad,
        transcendentals=M_pad * Ph_pad,
        bytes_accessed=(M_pad * 4 * n_p + P_pad * H_pad * 2 + H_pad * Ph_pad * 2
                        + Ph_pad * 4 + M_pad * Ph_pad * 2))
    h = pl.pallas_call(
        _embed_h_kernel,
        out_shape=jax.ShapeDtypeStruct((M_pad, Ph_pad), jnp.bfloat16),
        grid_spec=pltpu.PrefetchScalarGridSpec(
            num_scalar_prefetch=0,
            grid=(n_p, n_m),                       # p outer -> w1 streamed once
            in_specs=[
                pl.BlockSpec((tm, 1), lambda p, i: (i, 0)),          # indices
                pl.BlockSpec((P_pad, H_pad), lambda p, i: (0, 0)),   # emb table
                pl.BlockSpec((H_pad, tp), lambda p, i: (0, p)),      # w1 tile
                pl.BlockSpec((1, tp), lambda p, i: (0, p)),          # b1 tile
            ],
            out_specs=pl.BlockSpec((tm, tp), lambda p, i: (i, p)),
        ),
        compiler_params=pltpu.CompilerParams(
            dimension_semantics=("parallel", "parallel"),
            vmem_limit_bytes=_vmem_limit(need_a)),
        cost_estimate=cost_a,
    )(idx, arrays["emb"], arrays["w1"], arrays["b1"])

    # ---- kernel B: out = h @ w2 + b2 ----
    out_isz = jnp.dtype(out_dtype).itemsize
    need_b = 2 * (tm * Ph_pad * 2 + Ph_pad * tn * 2 + tn * 4 + tm * tn * out_isz)
    cost_b = pl.CostEstimate(
        flops=2 * M_pad * Ph_pad * O_pad,
        transcendentals=0,
        bytes_accessed=(M_pad * Ph_pad * 2 * n_n + Ph_pad * O_pad * 2
                        + O_pad * 4 + M_pad * O_pad * out_isz))
    out = pl.pallas_call(
        _out_kernel,
        out_shape=jax.ShapeDtypeStruct((M_pad, O_pad), out_dtype),
        grid_spec=pltpu.PrefetchScalarGridSpec(
            num_scalar_prefetch=0,
            grid=(n_n, n_m),                       # j outer -> w2 streamed once
            in_specs=[
                pl.BlockSpec((tm, Ph_pad), lambda j, i: (i, 0)),     # h tile
                pl.BlockSpec((Ph_pad, tn), lambda j, i: (0, j)),     # w2 tile
                pl.BlockSpec((1, tn), lambda j, i: (0, j)),          # b2 tile
            ],
            out_specs=pl.BlockSpec((tm, tn), lambda j, i: (i, j)),
        ),
        compiler_params=pltpu.CompilerParams(
            dimension_semantics=("parallel", "parallel"),
            vmem_limit_bytes=_vmem_limit(need_b)),
        cost_estimate=cost_b,
    )(h, arrays["w2"], arrays["b2"])

    return out[:M, :O].reshape(B, L, O)


def make_params(key, pre_seq_len, hidden_size, prefix_hidden_size, num_hidden_layers):
    k0, k1, k2, k3, k4 = jax.random.split(key, 5)
    out_dim = num_hidden_layers * 2 * hidden_size
    emb_table = jax.random.normal(k0, (pre_seq_len, hidden_size), jnp.float32)
    w1 = jax.random.normal(k1, (hidden_size, prefix_hidden_size), jnp.float32) * 0.05
    b1 = jax.random.normal(k2, (prefix_hidden_size,), jnp.float32) * 0.05
    w2 = jax.random.normal(k3, (prefix_hidden_size, out_dim), jnp.float32) * 0.05
    b2 = jax.random.normal(k4, (out_dim,), jnp.float32) * 0.05
    return emb_table, w1, b1, w2, b2


if __name__ == "__main__":
    # Small shapes consistent with the module.
    batch = 2
    pre_seq_len = 8          # prefix length == embedding table size
    hidden_size = 32
    prefix_hidden_size = 32
    num_hidden_layers = 6    # output dim = 6 * 2 * 32 = 384

    key = jax.random.PRNGKey(0)
    kp, kx = jax.random.split(key)
    emb_table, w1, b1, w2, b2 = make_params(
        kp, pre_seq_len, hidden_size, prefix_hidden_size, num_hidden_layers)

    # prefix indices: (batch, prefix_len) in [0, pre_seq_len)
    prefix = jax.random.randint(kx, (batch, pre_seq_len), 0, pre_seq_len, jnp.int32)

    # Pad/cast weights ONCE (hoisted out of the per-call path), then run forward.
    arrays, meta = prepare_prefix_encoder_params(emb_table, w1, b1, w2, b2)
    arrays = jax.tree_util.tree_map(jax.block_until_ready, arrays)

    out = prefix_encoder_forward(prefix, arrays, meta)
    out = jax.block_until_ready(out)

    # f32 reference (kernel uses bf16 weights/activations with f32 accumulation,
    # and h is round-tripped through bf16 between the two kernels).
    tok = jnp.take(emb_table, prefix, axis=0)
    ref = jnp.tanh(tok @ w1 + b1) @ w2 + b2
    assert out.shape == (batch, pre_seq_len, num_hidden_layers * 2 * hidden_size)
    assert jnp.allclose(out, ref, atol=5e-2, rtol=5e-2), "mismatch vs reference"

    print("KERNEL_OK")
</pallas_src>

<mosaic_0001>
module attributes {stable_mosaic.version = 11 : i64} {
  func.func @_embed_h_kernel(%arg0: i32, %arg1: i32, %arg2: memref<16x1xi32, #tpu.memory_space<vmem>>, %arg3: memref<8x128xbf16, #tpu.memory_space<vmem>>, %arg4: memref<128x128xbf16, #tpu.memory_space<vmem>>, %arg5: memref<1x128xf32, #tpu.memory_space<vmem>>, %arg6: memref<16x128xbf16, #tpu.memory_space<vmem>>) attributes {dimension_semantics = [#tpu.dimension_semantics<parallel>, #tpu.dimension_semantics<parallel>], iteration_bounds = array<i64: 1, 1>, scalar_prefetch = 0 : i64, scratch_operands = 0 : i64, tpu.core_type = #tpu.core_type<tc>, window_params = [{transform_indices = @transform_0, window_bounds = array<i64: 16, 1>}, {pipeline_mode = #tpu.pipeline_mode<synchronous>, transform_indices = @transform_1, window_bounds = array<i64: 8, 128>}, {transform_indices = @transform_2, window_bounds = array<i64: 128, 128>}, {transform_indices = @transform_3, window_bounds = array<i64: 1, 128>}, {transform_indices = @transform_4, window_bounds = array<i64: 16, 128>}]} {
    %c0 = arith.constant 0 : index
    %c0_0 = arith.constant 0 : index
    %0 = vector.load %arg2[%c0, %c0_0] : memref<16x1xi32, #tpu.memory_space<vmem>>, vector<16x1xi32>
    %1 = tpu.iota {dimensions = array<i32: 1>} : vector<16x8xi32>
    %2 = vector.broadcast %0 : vector<16x1xi32> to vector<16x8xi32>
    %3 = arith.cmpi eq, %1, %2 : vector<16x8xi32>
    %4 = arith.extui %3 : vector<16x8xi1> to vector<16x8xi32>
    %5 = arith.sitofp %4 : vector<16x8xi32> to vector<16x8xf32>
    %6 = arith.truncf %5 : vector<16x8xf32> to vector<16x8xbf16>
    %c0_1 = arith.constant 0 : index
    %c0_2 = arith.constant 0 : index
    %7 = vector.load %arg3[%c0_1, %c0_2] : memref<8x128xbf16, #tpu.memory_space<vmem>>, vector<8x128xbf16>
    %cst = arith.constant dense<0.000000e+00> : vector<16x128xf32>
    %8 = tpu.matmul %6, %7, %cst {dimension_numbers = #tpu.dot_dimension_numbers<[1], [0], [0], [1], [0, 0, 1, 1], [], []>} : vector<16x8xbf16>, vector<8x128xbf16>, vector<16x128xf32> -> vector<16x128xf32>
    %9 = arith.truncf %8 : vector<16x128xf32> to vector<16x128xbf16>
    %c0_3 = arith.constant 0 : index
    %c0_4 = arith.constant 0 : index
    %10 = vector.load %arg4[%c0_3, %c0_4] : memref<128x128xbf16, #tpu.memory_space<vmem>>, vector<128x128xbf16>
    %cst_5 = arith.constant dense<0.000000e+00> : vector<16x128xf32>
    %11 = tpu.matmul %9, %10, %cst_5 {dimension_numbers = #tpu.dot_dimension_numbers<[1], [0], [0], [1], [0, 0, 1, 1], [], []>} : vector<16x128xbf16>, vector<128x128xbf16>, vector<16x128xf32> -> vector<16x128xf32>
    %c0_6 = arith.constant 0 : index
    %c0_7 = arith.constant 0 : index
    %12 = vector.load %arg5[%c0_6, %c0_7] : memref<1x128xf32, #tpu.memory_space<vmem>>, vector<1x128xf32>
    %13 = vector.broadcast %12 : vector<1x128xf32> to vector<16x128xf32>
    %14 = arith.addf %11, %13 : vector<16x128xf32>
    %15 = math.tanh %14 : vector<16x128xf32>
    %16 = arith.truncf %15 : vector<16x128xf32> to vector<16x128xbf16>
    %c0_8 = arith.constant 0 : index
    %c0_9 = arith.constant 0 : index
    %17 = vector.load %arg6[%c0_8, %c0_9] : memref<16x128xbf16, #tpu.memory_space<vmem>>, vector<16x128xbf16>
    tpu.vector_store %arg6[%c0_8, %c0_9], %16 {strides = array<i32>} : memref<16x128xbf16, #tpu.memory_space<vmem>>, vector<16x128xbf16>,
    return
  }
  func.func @transform_0(%arg0: i32, %arg1: i32) -> (i32, i32) {
    %c0_i32 = arith.constant 0 : i32
    %c0_i32_0 = arith.constant 0 : i32
    return %arg1, %c0_i32 : i32, i32
  }
  func.func @transform_1(%arg0: i32, %arg1: i32) -> (i32, i32) {
    %c0_i32 = arith.constant 0 : i32
    %c0_i32_0 = arith.constant 0 : i32
    %c0_i32_1 = arith.constant 0 : i32
    return %c0_i32, %c0_i32_0 : i32, i32
  }
  func.func @transform_2(%arg0: i32, %arg1: i32) -> (i32, i32) {
    %c0_i32 = arith.constant 0 : i32
    %c0_i32_0 = arith.constant 0 : i32
    return %c0_i32, %arg0 : i32, i32
  }
  func.func @transform_3(%arg0: i32, %arg1: i32) -> (i32, i32) {
    %c0_i32 = arith.constant 0 : i32
    %c0_i32_0 = arith.constant 0 : i32
    return %c0_i32, %arg0 : i32, i32
  }
  func.func @transform_4(%arg0: i32, %arg1: i32) -> (i32, i32) {
    %c0_i32 = arith.constant 0 : i32
    return %arg1, %arg0 : i32, i32
  }
}

</mosaic_0001>

<llo_original>
// kernel: tpu_custom_call.1
$region0: #{tpu_custom_call.1}
  #allocation0 [shape = 'u32[]', space=smem, size = 0x4, offset = 0x4, fixed_abs, tag = 'smem constant byte address 0x4 - core index']
  #allocation1 [shape = 'u32[144,128]{1,0:T(1,128)}', space=vmem, size = 0x12000, scoped, tag = 'internal scratch']
  %s0 = inlined_call_operand.vmem [shape: s32[16,1], index: 0, kind: input, shape index: {}]
  %s1 = inlined_call_operand.vmem [shape: bf16[8,128], index: 1, kind: input, shape index: {}]
  %s2 = inlined_call_operand.hbm [shape: bf16[128,128], index: 2, kind: input, shape index: {}]
  %s3 = inlined_call_operand.vmem [shape: f32[1,128], index: 3, kind: input, shape index: {}]
  %s4 = inlined_call_operand.hbm [shape: bf16[16,128], index: 4, kind: output, shape index: {}]
  %s5 = sld [smem:[#allocation0]]
  $region30: #{tpu_custom_call.1} parent=0
    _
  %s7 = ssub.s32 1, %s5
  %s8 = scalar_select 0, %s7, %s5
  $region1: #{tpu_custom_call.1} parent=0
    #allocation2 [shape = 'u8[32768]{0}', space=vmem, size = 0x8000, scoped, tag = 'input window, operand 2, single buffered']
    #allocation3 [shape = 's32[1]{0}', space=sflag, size = 0x4, scoped, tag = 'scoped memory for tpu_custom_call.1']
    #allocation4 [shape = 's32[1]{0}', space=sflag, size = 0x4, scoped, tag = 'scoped memory for tpu_custom_call.1']
    #allocation5 [shape = 'u8[4096]{0}', space=vmem, size = 0x1000, scoped, tag = 'output window, operand 0, single buffered']
    %9 = vsyncpa [#allocation3], 0
    %10 = vsyncpa [#allocation4], 0
    // Predicated region
    $region2: #{tpu_custom_call.1} parent=1 // pred_check
      _
    $region3: #{tpu_custom_call.1} parent=1 // pred_check_branch
      %12 = sbr.rel (0) target = $region5
    $region4: #{tpu_custom_call.1} parent=1 // pred_region
      _
    $region5: #{tpu_custom_call.1} parent=1 // pred_fallthru
      _
    // Predicated region
    $region6: #{tpu_custom_call.1} parent=1 // pred_check
      _
    $region7: #{tpu_custom_call.1} parent=1 // pred_check_branch
      %14 = sbr.rel (0) target = $region9
    $region8: #{tpu_custom_call.1} parent=1 // pred_region
      _
    $region9: #{tpu_custom_call.1} parent=1 // pred_fallthru
      _
    // Predicated region
    $region10: #{tpu_custom_call.1} parent=1 // pred_check
      _
    $region11: #{tpu_custom_call.1} parent=1 // pred_check_branch
      %16 = sbr.rel (0) target = $region13
    $region12: #{tpu_custom_call.1} parent=1 // pred_region
      %s18 = ssub.s32 1024, 1024
      %19 = vsyncadd [#allocation3], %s18
      %s20 = sshll.u32 [#allocation2], 4
      %s21 = int_to_ptr.vmem [resolvable:$true] %s20
      %26 = dma.hbm_to_vmem [thread:$0]  %s2, 1024, %s21, [#allocation3], 64, 64, 4
    $region13: #{tpu_custom_call.1} parent=1 // pred_fallthru
      _
    // Predicated region
    $region14: #{tpu_custom_call.1} parent=1 // pred_check
      _
    $region15: #{tpu_custom_call.1} parent=1 // pred_check_branch
      %28 = sbr.rel (0) target = $region17
    $region16: #{tpu_custom_call.1} parent=1 // pred_region
      _
    $region17: #{tpu_custom_call.1} parent=1 // pred_fallthru
      _
    // Predicated region
    $region18: #{tpu_custom_call.1} parent=1 // pred_check
      _
    $region19: #{tpu_custom_call.1} parent=1 // pred_check_branch
      %30 = sbr.rel (0) target = $region21
    $region20: #{tpu_custom_call.1} parent=1 // pred_region
      %31 = dma.done [#allocation3], 1024
    $region21: #{tpu_custom_call.1} parent=1 // pred_fallthru
      _
    %v33 = vld [vmem:[%s0] sm:$0xff]
    %v34 = vld [vmem:[%s0 + $0x8] sm:$0xff]
    %v35 = vlaneseq
    %v36 = vand.u32 %v35, 127
    %37 = vset.pattern.permute.xlu0 0
    %38 = vperm.xlu0 %37, %v33
    %v39 = vpop.permute.xlu0 %38
    %40 = vset.pattern.permute.xlu0 0
    %41 = vperm.xlu0 %40, %v34
    %v42 = vpop.permute.xlu0 %41
    %vm43 = vcmp.eq.s32.totalorder %v36, %v39
    %vm44 = vcmp.eq.s32.totalorder %v36, %v42
    %v45 = vsel %vm43, 1, 0
    %v46 = vsel %vm44, 1, 0
    %v47 = vcvt.s32.f32 %v45
    %v48 = vcvt.s32.f32 %v46
    %v49 = vpack.c.bf16 %v48, %v47
    %v50 = vld [vmem:[%s1] sm:$0xf]
    %vm51 = vcmask 64512
    %v53 = vsel %vm51, %v49, 0
    %vm55 = vcmask 1043456
    %v57 = vsel %vm55, %v50, 0
    %59 = vmatprep.subr.bf16.mxu0 0
    %60 = vmatpush1.bf16.msra.mxu0 0
    %61 = vmatprep.subr.bf16.mxu0 0
    %62 = vmatpush1.bf16.msra.mxu0 0
    %63 = vmatprep.subr.bf16.mxu0 0
    %64 = vmatpush1.bf16.msra.mxu0 0
    %65 = vmatprep.subr.bf16.mxu0 0
    %66 = vmatpush1.bf16.msra.mxu0 0
    %67 = vmatprep.subr.bf16.mxu0 0
    %68 = vmatpush1.bf16.msra.mxu0 0
    %69 = vmatprep.subr.bf16.mxu0 0
    %70 = vmatpush1.bf16.msra.mxu0 0
    %71 = vmatprep.subr.bf16.mxu0 0
    %72 = vmatpush1.bf16.msra.mxu0 0
    %73 = vmatprep.subr.bf16.mxu0 0
    %74 = vmatpush1.bf16.msra.mxu0 %v57
    %75 = vmatprep.subr.bf16.mxu0 0
    %76 = vmatpush2.bf16.msra.mxu0 0
    %77 = vmatprep.subr.bf16.mxu0 0
    %78 = vmatpush2.bf16.msra.mxu0 0
    %79 = vmatprep.subr.bf16.mxu0 0
    %80 = vmatpush2.bf16.msra.mxu0 0
    %81 = vmatprep.subr.bf16.mxu0 0
    %82 = vmatpush2.bf16.msra.mxu0 0
    %83 = vmatprep.subr.bf16.mxu0 0
    %84 = vmatpush2.bf16.msra.mxu0 0
    %85 = vmatprep.subr.bf16.mxu0 0
    %86 = vmatpush2.bf16.msra.mxu0 0
    %87 = vmatprep.subr.bf16.mxu0 0
    %88 = vmatpush2.bf16.msra.mxu0 0
    %89 = vmatprep.subr.bf16.mxu0 0
    %90 = vmatpush2.bf16.msra.mxu0 0
    %91 = vmatprep.mubr.bf16.mxu0 0
    %92 = vmatmul.mubr.bf16.gmra.mxu0 %v53
    %v93 = vpop.f32.mrf.mxu0
    %v94 = vadd.f32 0.0, %v93
    %v95 = vpop.f32.mrf.mxu0
    %v96 = vpop.f32.mrf.mxu0
    %v97 = vadd.f32 0.0, %v96
    %v98 = vpop.f32.mrf.mxu0
    %99 = vdwg.mxu0
    %v100 = vpack.c.bf16 %v97, %v94
    %v101 = vld [vmem:[#allocation2] sm:$0xf]
    %v102 = vld [vmem:[#allocation2 + $0x4] sm:$0xf]
    %v103 = vld [vmem:[#allocation2 + $0x8] sm:$0xf]
    %v104 = vld [vmem:[#allocation2 + $0xc] sm:$0xf]
    %v105 = vld [vmem:[#allocation2 + $0x10] sm:$0xf]
    %v106 = vld [vmem:[#allocation2 + $0x14] sm:$0xf]
    %v107 = vld [vmem:[#allocation2 + $0x18] sm:$0xf]
    %v108 = vld [vmem:[#allocation2 + $0x1c] sm:$0xf]
    %v109 = vld [vmem:[#allocation2 + $0x20] sm:$0xf]
    %v110 = vld [vmem:[#allocation2 + $0x24] sm:$0xf]
    %v111 = vld [vmem:[#allocation2 + $0x28] sm:$0xf]
    %v112 = vld [vmem:[#allocation2 + $0x2c] sm:$0xf]
    %v113 = vld [vmem:[#allocation2 + $0x30] sm:$0xf]
    %v114 = vld [vmem:[#allocation2 + $0x34] sm:$0xf]
    %v115 = vld [vmem:[#allocation2 + $0x38] sm:$0xf]
    %v116 = vld [vmem:[#allocation2 + $0x3c] sm:$0xf]
    %v117 = vld [vmem:[%s3] sm:$0x1]
    %v119 = vlaneseq
    %v120 = vshrl.u32 %v119, 7
    %v121 = vsub.s32 0, %v120
    %v122 = vrot.slane %v117, %v121
    %v140 = vunpack.c.l.b16 %v101
    %v141 = vunpack.c.l.b16 %v102
    %v142 = vunpack.c.l.b16 %v103
    %v143 = vunpack.c.l.b16 %v104
    %v144 = vunpack.c.l.b16 %v105
    %v145 = vunpack.c.l.b16 %v106
    %v146 = vunpack.c.l.b16 %v107
    %v147 = vunpack.c.l.b16 %v108
    %v148 = vunpack.c.l.b16 %v109
    %v149 = vunpack.c.l.b16 %v110
    %v150 = vunpack.c.l.b16 %v111
    %v151 = vunpack.c.l.b16 %v112
    %v152 = vunpack.c.l.b16 %v113
    %v153 = vunpack.c.l.b16 %v114
    %v154 = vunpack.c.l.b16 %v115
    %v155 = vunpack.c.l.b16 %v116
    %v156 = vpack.c.b16 %v141, %v140
    %v157 = vpack.c.b16 %v143, %v142
    %v158 = vpack.c.b16 %v145, %v144
    %v159 = vpack.c.b16 %v147, %v146
    %v160 = vpack.c.b16 %v149, %v148
    %v161 = vpack.c.b16 %v151, %v150
    %v162 = vpack.c.b16 %v153, %v152
    %v163 = vpack.c.b16 %v155, %v154
    %172 = vmatprep.subr.bf16.mxu0 0
    %173 = vmatpush1.bf16.msra.mxu0 %v163
    %174 = vmatprep.subr.bf16.mxu0 0
    %175 = vmatpush1.bf16.msra.mxu0 %v162
    %176 = vmatprep.subr.bf16.mxu0 0
    %177 = vmatpush1.bf16.msra.mxu0 %v161
    %178 = vmatprep.subr.bf16.mxu0 0
    %179 = vmatpush1.bf16.msra.mxu0 %v160
    %180 = vmatprep.subr.bf16.mxu0 0
    %181 = vmatpush1.bf16.msra.mxu0 %v159
    %182 = vmatprep.subr.bf16.mxu0 0
    %183 = vmatpush1.bf16.msra.mxu0 %v158
    %184 = vmatprep.subr.bf16.mxu0 0
    %185 = vmatpush1.bf16.msra.mxu0 %v157
    %186 = vmatprep.subr.bf16.mxu0 0
    %187 = vmatpush1.bf16.msra.mxu0 %v156
    %188 = vmatprep.subr.bf16.mxu0 0
    %189 = vmatpush2.bf16.msra.mxu0 0
    %190 = vmatprep.subr.bf16.mxu0 0
    %191 = vmatpush2.bf16.msra.mxu0 0
    %192 = vmatprep.subr.bf16.mxu0 0
    %193 = vmatpush2.bf16.msra.mxu0 0
    %194 = vmatprep.subr.bf16.mxu0 0
    %195 = vmatpush2.bf16.msra.mxu0 0
    %196 = vmatprep.subr.bf16.mxu0 0
    %197 = vmatpush2.bf16.msra.mxu0 0
    %198 = vmatprep.subr.bf16.mxu0 0
    %199 = vmatpush2.bf16.msra.mxu0 0
    %200 = vmatprep.subr.bf16.mxu0 0
    %201 = vmatpush2.bf16.msra.mxu0 0
    %202 = vmatprep.subr.bf16.mxu0 0
    %203 = vmatpush2.bf16.msra.mxu0 0
    %204 = vmatprep.mubr.bf16.mxu0 0
    %205 = vmatmul.mubr.bf16.gmra.mxu0 %v100
    %v206 = vpop.f32.mrf.mxu0
    %v207 = vadd.f32 %v122, %v206
    %v208 = vpop.f32.mrf.mxu0
    %v209 = vpop.f32.mrf.mxu0
    %v210 = vadd.f32 %v122, %v209
    %v211 = vpop.f32.mrf.mxu0
    %212 = vdwg.mxu0
    %v213 = vtanh.pop %v207
    %v214 = vtanh.pop %v210
    %v215 = vpack.c.bf16 %v214, %v213
    %v217 = vunpack.c.l.b16 %v215
    %v218 = vunpack.c.h.b16 %v215
    %v219 = vpack.c.b16 %v217, %v217
    %v220 = vpack.c.b16 %v218, %v218
    %223 = vst [vmem:[#allocation5] sm:$0xf] %v219
    %224 = vst [vmem:[#allocation5 + $0x4] sm:$0xf] %v220
    // Predicated region
    $region22: #{tpu_custom_call.1} parent=1 // pred_check
      _
    $region23: #{tpu_custom_call.1} parent=1 // pred_check_branch
      %226 = sbr.rel (0) target = $region25
    $region24: #{tpu_custom_call.1} parent=1 // pred_region
      %s228 = ssub.s32 128, 128
      %229 = vsyncadd [#allocation4], %s228
      %s230 = sshll.u32 [#allocation5], 4
      %s231 = int_to_ptr.vmem [resolvable:$true] %s230
      %236 = dma.vmem_to_hbm [thread:$0]  %s231, 128, %s4, [#allocation4], 64, 64, 4
    $region25: #{tpu_custom_call.1} parent=1 // pred_fallthru
      _
    // Predicated region
    $region26: #{tpu_custom_call.1} parent=1 // pred_check
      _
    $region27: #{tpu_custom_call.1} parent=1 // pred_check_branch
      %238 = sbr.rel (0) target = $region29
    $region28: #{tpu_custom_call.1} parent=1 // pred_region
      %239 = dma.done [#allocation4], 128
    $region29: #{tpu_custom_call.1} parent=1 // pred_fallthru
      _
    %240 = vsyncpa [#allocation3], 1
    %241 = vsyncpa [#allocation4], 1

</llo_original>
